<compile_context>
chip_gen: v7x
topology: tpu7x:2x2x1
jax: 0.10.0
libtpu: 0.0.40
codegen_flags: <defaults>
</compile_context>

<pallas_src>
import jax
import jax.numpy as jnp
from jax.experimental import pallas as pl
from jax.experimental.pallas import tpu as pltpu

NER_NUM = 7
NODE_ATTR_NUM = 3
OUTPUT_NUM = 97
REL_TYPE_NUM = 15  # relEmb exists in the module; unused by the stand-in GNN.

VMEM_LIMIT = 32 * 1024 * 1024  # explicit (v5e default scoped VMEM is 16 MiB)


# ----------------------------------------------------------------------------
# helpers
# ----------------------------------------------------------------------------
def _round_up(x, m):
    return (x + m - 1) // m * m


def _pad_axis(a, axis, target):
    pad = target - a.shape[axis]
    if pad == 0:
        return a
    widths = [(0, 0)] * a.ndim
    widths[axis] = (0, pad)
    return jnp.pad(a, widths)


def _pick_row_tile(m, max_tile=512):
    """Row tile: <=512 rows (v6e sweet spot), and try to give the parallel
    grid at least 2 steps so both v7x TensorCores are used."""
    if m <= 8:
        return 8
    if m <= 2 * max_tile:
        return _round_up(-(-m // 2), 8)   # ceil(m/2), 8-aligned -> >= 2 tiles
    return max_tile


# ----------------------------------------------------------------------------
# Kernel 1: fused span pooling + node projection (GNN stand-in)
#
#   pooled   = (mask[b] @ tok[b]) * inv[b]                (bf16 MXU, f32 acc)
#   acc      = extra[b] + sum_e pooled[:, e-block] @ W_span[e-block]
#   node_out = tanh(acc)                                   (bf16 output)
#
#   extra[b] = ner_feat @ W_ner + attr_feat @ W_attr + gnn_b   (tiny, wrapper)
#   inv[b]   = 1 / (span_len + 1e-6)                           (exact, wrapper)
# ----------------------------------------------------------------------------
def fused_node_kernel(mask_ref, tok_ref, inv_ref, wspan_ref, extra_ref,
                      out_ref, acc_ref):
    e = pl.program_id(1)

    @pl.when(e == 0)
    def _():
        acc_ref[...] = extra_ref[0]                       # (N, Dp) f32

    # span average pooling for this embed block (bf16 MXU, f32 accumulate)
    pooled = jnp.dot(mask_ref[0], tok_ref[0],
                     preferred_element_type=jnp.float32)  # (N, TE)
    pooled = pooled * inv_ref[0]                          # exact 1/(len+1e-6)

    # K-accumulate against the span rows of the GNN weight
    acc_ref[...] += jnp.dot(pooled.astype(jnp.bfloat16), wspan_ref[...],
                            preferred_element_type=jnp.float32)

    @pl.when(e == pl.num_programs(1) - 1)
    def _():
        out_ref[0] = jnp.tanh(acc_ref[...]).astype(out_ref.dtype)


def fused_node(mask_bf16, tok_bf16, inv, w_span, extra):
    bsz, n_nodes, seq = mask_bf16.shape
    _, _, emb = tok_bf16.shape
    dp = w_span.shape[1]
    # Block the embed (reduction) dim when it is large (BERT-sized).
    if emb > 512 and emb % 256 == 0:
        te = 256
    elif emb > 512 and emb % 128 == 0:
        te = 128
    else:
        te = emb
    n_eb = emb // te
    return pl.pallas_call(
        fused_node_kernel,
        out_shape=jax.ShapeDtypeStruct((bsz, n_nodes, dp), jnp.bfloat16),
        grid=(bsz, n_eb),
        in_specs=[
            pl.BlockSpec((1, n_nodes, seq), lambda b, e: (b, 0, 0)),
            pl.BlockSpec((1, seq, te), lambda b, e: (b, 0, e)),
            pl.BlockSpec((1, n_nodes, 1), lambda b, e: (b, 0, 0)),
            pl.BlockSpec((te, dp), lambda b, e: (e, 0)),
            pl.BlockSpec((1, n_nodes, dp), lambda b, e: (b, 0, 0)),
        ],
        out_specs=pl.BlockSpec((1, n_nodes, dp), lambda b, e: (b, 0, 0)),
        scratch_shapes=[pltpu.VMEM((n_nodes, dp), jnp.float32)],
        compiler_params=pltpu.CompilerParams(
            dimension_semantics=("parallel", "arbitrary"),
            vmem_limit_bytes=VMEM_LIMIT),
    )(mask_bf16, tok_bf16, inv, w_span, extra)


# ----------------------------------------------------------------------------
# Kernel 2: pair prediction head (cat-free MLP)
#   hid = h@W1a + t@W1b + |h-t|@W1c + (h*t)@W1d + b1 ; relu
#   out = hid @ W2p + b2p          (W2 lane-padded 97 -> 128, sliced outside)
# ----------------------------------------------------------------------------
def pred_head_kernel(h_ref, t_ref, w1a_ref, w1b_ref, w1c_ref, w1d_ref,
                     b1_ref, w2_ref, b2_ref, out_ref):
    h = h_ref[...]                                        # (TM, Dp) bf16
    t = t_ref[...]

    # Split-W1 K-accumulation replaces cat([h, t, |h-t|, h*t]).
    hid = jnp.dot(h, w1a_ref[...], preferred_element_type=jnp.float32)
    hid += jnp.dot(t, w1b_ref[...], preferred_element_type=jnp.float32)
    hid += jnp.dot(jnp.abs(h - t), w1c_ref[...],
                   preferred_element_type=jnp.float32)
    hid += jnp.dot(h * t, w1d_ref[...],
                   preferred_element_type=jnp.float32)
    hid = jnp.maximum(hid + b1_ref[...], 0.0)             # pred_activation='relu'

    out = jnp.dot(hid.astype(jnp.bfloat16), w2_ref[...],
                  preferred_element_type=jnp.float32)
    out_ref[...] = out + b2_ref[...]


def pred_head(h, t, w1a, w1b, w1c, w1d, b1, w2, b2, *, max_tile=512):
    m, dp = h.shape
    hp = w1a.shape[1]
    outp = w2.shape[1]
    tm = _pick_row_tile(m, max_tile)
    m_pad = _round_up(m, tm)
    h_p = _pad_axis(h, 0, m_pad)
    t_p = _pad_axis(t, 0, m_pad)
    const = lambda i: (0, 0)
    return pl.pallas_call(
        pred_head_kernel,
        out_shape=jax.ShapeDtypeStruct((m_pad, outp), jnp.float32),
        grid=(m_pad // tm,),
        in_specs=[
            pl.BlockSpec((tm, dp), lambda i: (i, 0)),
            pl.BlockSpec((tm, dp), lambda i: (i, 0)),
            pl.BlockSpec((dp, hp), const),
            pl.BlockSpec((dp, hp), const),
            pl.BlockSpec((dp, hp), const),
            pl.BlockSpec((dp, hp), const),
            pl.BlockSpec((1, hp), const),
            pl.BlockSpec((hp, outp), const),
            pl.BlockSpec((1, outp), const),
        ],
        out_specs=pl.BlockSpec((tm, outp), lambda i: (i, 0)),
        compiler_params=pltpu.CompilerParams(
            dimension_semantics=("parallel",),
            vmem_limit_bytes=VMEM_LIMIT),
    )(h_p, t_p, w1a, w1b, w1c, w1d, b1, w2, b2)


# ----------------------------------------------------------------------------
# Parameters
# ----------------------------------------------------------------------------
def xavier_normal(key, shape):
    fan_in, fan_out = shape[0], shape[1]
    std = jnp.sqrt(2.0 / (fan_in + fan_out))
    return std * jax.random.normal(key, shape, dtype=jnp.float32)


def init_params(key, embed_dim, ner_dim, attr_dim, node_out_dim):
    node_in_dim = embed_dim + ner_dim + attr_dim
    ks = jax.random.split(key, 8)
    return {
        "ner_emb": xavier_normal(ks[0], (NER_NUM, ner_dim)),
        "attr_emb": xavier_normal(ks[1], (NODE_ATTR_NUM, attr_dim)),
        "rel_emb": xavier_normal(ks[2], (REL_TYPE_NUM, 8)),   # unused (see TODO)
        "gnn_w": xavier_normal(ks[3], (node_in_dim, node_out_dim)),
        "gnn_b": 0.01 * jax.random.normal(ks[4], (1, node_out_dim), dtype=jnp.float32),
        "fc1_w": xavier_normal(ks[5], (4 * node_out_dim, 2 * node_out_dim)),
        "fc1_b": 0.01 * jax.random.normal(ks[6], (1, 2 * node_out_dim), dtype=jnp.float32),
        "fc2_w": xavier_normal(ks[7], (2 * node_out_dim, OUTPUT_NUM)),
        "fc2_b": jnp.zeros((1, OUTPUT_NUM), dtype=jnp.float32),
    }


def prepare_params(params):
    """One-time prep: lane padding, bf16 casts, W-splits. Hoisted out of the
    jitted forward so padding/cast kernels don't rerun every inference."""
    ner_dim = params["ner_emb"].shape[1]
    attr_dim = params["attr_emb"].shape[1]
    embed_dim = params["gnn_w"].shape[0] - ner_dim - attr_dim
    d = params["gnn_w"].shape[1]            # node_out_dim
    h_dim = params["fc1_w"].shape[1]        # 2 * node_out_dim
    dp = _round_up(d, 128)
    hp = _round_up(h_dim, 128)
    outp = _round_up(OUTPUT_NUM, 128)

    gnn_w = params["gnn_w"]
    w_span = _pad_axis(gnn_w[:embed_dim], 1, dp).astype(jnp.bfloat16)
    w_ner = _pad_axis(gnn_w[embed_dim:embed_dim + ner_dim], 1, dp)       # f32
    w_attr = _pad_axis(gnn_w[embed_dim + ner_dim:], 1, dp)               # f32
    gnn_b = _pad_axis(params["gnn_b"], 1, dp)                            # (1, dp)

    w1 = params["fc1_w"]

    def _prep_w1(block):
        return _pad_axis(_pad_axis(block, 0, dp), 1, hp).astype(jnp.bfloat16)

    prep = {
        "ner_emb": params["ner_emb"],
        "attr_emb": params["attr_emb"],
        "w_span": w_span, "w_ner": w_ner, "w_attr": w_attr, "gnn_b": gnn_b,
        "w1a": _prep_w1(w1[0 * d:1 * d]),
        "w1b": _prep_w1(w1[1 * d:2 * d]),
        "w1c": _prep_w1(w1[2 * d:3 * d]),
        "w1d": _prep_w1(w1[3 * d:4 * d]),
        "b1": _pad_axis(params["fc1_b"], 1, hp),
        "w2": _pad_axis(_pad_axis(params["fc2_w"], 0, hp), 1, outp).astype(jnp.bfloat16),
        "b2": _pad_axis(params["fc2_b"], 1, outp),
    }
    return jax.tree_util.tree_map(jnp.asarray, prep)


# ----------------------------------------------------------------------------
# Full forward pass
# ----------------------------------------------------------------------------
@jax.jit
def final_model_forward(prep, token_feature, span_mask, ner_id, attr_id, ent_pair):
    """
    token_feature : (bsz, seq, embed_dim)   f32  (stand-in for BertEmbedding output)
    span_mask     : (bsz, n_nodes, seq)     f32  {0,1} per-node token span mask
    ner_id        : (bsz, n_nodes)          i32
    attr_id       : (bsz, n_nodes)          i32
    ent_pair      : (bsz, n_pairs, 2)       i32  node indices local to each graph
    returns       : (bsz, n_pairs, OUTPUT_NUM) f32
    """
    bsz, n_nodes, _ = span_mask.shape
    n_pairs = ent_pair.shape[1]
    dp = prep["w_span"].shape[1]

    # --- span lengths once per node, exact division (matches torch.div) ---
    lens = jnp.sum(span_mask, axis=2, keepdims=True)            # (bsz, N, 1) f32
    inv = 1.0 / (lens + 1e-6)

    # --- tiny NER / attr embedding gathers + their GNN contribution (glue) ---
    ner_feat = jnp.take(prep["ner_emb"], ner_id, axis=0)        # (bsz, N, ner)
    attr_feat = jnp.take(prep["attr_emb"], attr_id, axis=0)     # (bsz, N, attr)
    extra = (jnp.einsum("bnk,kd->bnd", ner_feat, prep["w_ner"])
             + jnp.einsum("bnk,kd->bnd", attr_feat, prep["w_attr"])
             + prep["gnn_b"])                                   # (bsz, N, dp) f32

    # --- fused span pooling + GNN stand-in projection (Pallas) ---
    # TODO(synk): real multiLayerRGAT/RGCN message passing not provided; replaced
    #             by a single node-wise linear + tanh (relEmb unused).
    node_out = fused_node(span_mask.astype(jnp.bfloat16),
                          token_feature.astype(jnp.bfloat16),
                          inv, prep["w_span"], extra)           # (bsz, N, dp) bf16

    # --- per-graph node offsets + h/t gather in the wrapper (small gathers) ---
    offsets = (jnp.arange(bsz, dtype=jnp.int32) * n_nodes)[:, None, None]
    pair_global = (ent_pair.astype(jnp.int32) + offsets).reshape(bsz * n_pairs, 2)
    node_flat = node_out.reshape(bsz * n_nodes, dp)
    h_feat = jnp.take(node_flat, pair_global[:, 0], axis=0)     # (M, dp) bf16
    t_feat = jnp.take(node_flat, pair_global[:, 1], axis=0)

    # --- pair prediction head (Pallas, lane-dense 128-wide output) ---
    logits_pad = pred_head(h_feat, t_feat, prep["w1a"], prep["w1b"], prep["w1c"],
                           prep["w1d"], prep["b1"], prep["w2"], prep["b2"])
    logits = logits_pad[:bsz * n_pairs, :OUTPUT_NUM]
    return logits.reshape(bsz, n_pairs, OUTPUT_NUM)


if __name__ == "__main__":
    # Small deterministic shapes consistent with the forward pass.
    bsz, seq, embed_dim = 2, 16, 32
    n_nodes, n_pairs = 8, 4
    ner_dim, attr_dim, node_out_dim = 8, 8, 32

    key = jax.random.PRNGKey(0)
    k_par, k_tok, k_mask, k_ner, k_attr, k_pair = jax.random.split(key, 6)

    params = init_params(k_par, embed_dim, ner_dim, attr_dim, node_out_dim)
    prep = prepare_params(params)      # one-time weight prep (hoisted)

    token_feature = jax.random.normal(k_tok, (bsz, seq, embed_dim), dtype=jnp.float32)
    span_mask = (jax.random.uniform(k_mask, (bsz, n_nodes, seq)) < 0.3).astype(jnp.float32)
    # Guarantee every node spans at least one token (avoids all-zero rows).
    span_mask = span_mask.at[:, :, 0].set(1.0)
    ner_id = jax.random.randint(k_ner, (bsz, n_nodes), 0, NER_NUM, dtype=jnp.int32)
    attr_id = jax.random.randint(k_attr, (bsz, n_nodes), 0, NODE_ATTR_NUM, dtype=jnp.int32)
    ent_pair = jax.random.randint(k_pair, (bsz, n_pairs, 2), 0, n_nodes, dtype=jnp.int32)

    out = final_model_forward(prep, token_feature, span_mask, ner_id, attr_id, ent_pair)
    out = jax.block_until_ready(out)
    assert out.shape == (bsz, n_pairs, OUTPUT_NUM), out.shape
    assert jnp.all(jnp.isfinite(out))
    print("KERNEL_OK")
</pallas_src>

<mosaic_0001>
module attributes {stable_mosaic.version = 11 : i64} {
  func.func @fused_node_kernel(%arg0: i32, %arg1: i32, %arg2: memref<1x8x16xbf16, #tpu.memory_space<vmem>>, %arg3: memref<1x16x32xbf16, #tpu.memory_space<vmem>>, %arg4: memref<1x8x1xf32, #tpu.memory_space<vmem>>, %arg5: memref<32x128xbf16, #tpu.memory_space<vmem>>, %arg6: memref<1x8x128xf32, #tpu.memory_space<vmem>>, %arg7: memref<1x8x128xbf16, #tpu.memory_space<vmem>>, %arg8: memref<8x128xf32, #tpu.memory_space<vmem>>) attributes {dimension_semantics = [#tpu.dimension_semantics<parallel>, #tpu.dimension_semantics<arbitrary>], iteration_bounds = array<i64: 2, 1>, scalar_prefetch = 0 : i64, scratch_operands = 1 : i64, tpu.core_type = #tpu.core_type<tc>, window_params = [{transform_indices = @transform_0, window_bounds = array<i64: 1, 8, 16>}, {transform_indices = @transform_1, window_bounds = array<i64: 1, 16, 32>}, {transform_indices = @transform_2, window_bounds = array<i64: 1, 8, 1>}, {transform_indices = @transform_3, window_bounds = array<i64: 32, 128>}, {transform_indices = @transform_4, window_bounds = array<i64: 1, 8, 128>}, {transform_indices = @transform_5, window_bounds = array<i64: 1, 8, 128>}]} {
    %c0_i32 = arith.constant 0 : i32
    %0 = arith.cmpi eq, %arg1, %c0_i32 : i32
    %1 = arith.extui %0 : i1 to i32
    %c0_i32_0 = arith.constant 0 : i32
    %2 = arith.cmpi ne, %1, %c0_i32_0 : i32
    scf.if %2 {
      %c0_18 = arith.constant 0 : index
      %c0_19 = arith.constant 0 : index
      %c0_20 = arith.constant 0 : index
      %21 = vector.load %arg6[%c0_18, %c0_19, %c0_20] : memref<1x8x128xf32, #tpu.memory_space<vmem>>, vector<1x8x128xf32>
      %22 = vector.shape_cast %21 : vector<1x8x128xf32> to vector<8x128xf32>
      %c0_21 = arith.constant 0 : index
      %c0_22 = arith.constant 0 : index
      %23 = vector.load %arg8[%c0_21, %c0_22] : memref<8x128xf32, #tpu.memory_space<vmem>>, vector<8x128xf32>
      tpu.vector_store %arg8[%c0_21, %c0_22], %22 {strides = array<i32>} : memref<8x128xf32, #tpu.memory_space<vmem>>, vector<8x128xf32>,
    } else {
    }
    %c0 = arith.constant 0 : index
    %c0_1 = arith.constant 0 : index
    %c0_2 = arith.constant 0 : index
    %3 = vector.load %arg2[%c0, %c0_1, %c0_2] : memref<1x8x16xbf16, #tpu.memory_space<vmem>>, vector<1x8x16xbf16>
    %4 = vector.shape_cast %3 : vector<1x8x16xbf16> to vector<8x16xbf16>
    %c0_3 = arith.constant 0 : index
    %c0_4 = arith.constant 0 : index
    %c0_5 = arith.constant 0 : index
    %5 = vector.load %arg3[%c0_3, %c0_4, %c0_5] : memref<1x16x32xbf16, #tpu.memory_space<vmem>>, vector<1x16x32xbf16>
    %6 = vector.shape_cast %5 : vector<1x16x32xbf16> to vector<16x32xbf16>
    %cst = arith.constant dense<0.000000e+00> : vector<8x32xf32>
    %7 = tpu.matmul %4, %6, %cst {dimension_numbers = #tpu.dot_dimension_numbers<[1], [0], [0], [1], [0, 0, 1, 1], [], []>} : vector<8x16xbf16>, vector<16x32xbf16>, vector<8x32xf32> -> vector<8x32xf32>
    %c0_6 = arith.constant 0 : index
    %c0_7 = arith.constant 0 : index
    %c0_8 = arith.constant 0 : index
    %8 = vector.load %arg4[%c0_6, %c0_7, %c0_8] : memref<1x8x1xf32, #tpu.memory_space<vmem>>, vector<1x8x1xf32>
    %9 = vector.shape_cast %8 : vector<1x8x1xf32> to vector<8x1xf32>
    %10 = vector.broadcast %9 : vector<8x1xf32> to vector<8x32xf32>
    %11 = arith.mulf %7, %10 : vector<8x32xf32>
    %c0_9 = arith.constant 0 : index
    %c0_10 = arith.constant 0 : index
    %12 = vector.load %arg8[%c0_9, %c0_10] : memref<8x128xf32, #tpu.memory_space<vmem>>, vector<8x128xf32>
    %13 = arith.truncf %11 : vector<8x32xf32> to vector<8x32xbf16>
    %c0_11 = arith.constant 0 : index
    %c0_12 = arith.constant 0 : index
    %14 = vector.load %arg5[%c0_11, %c0_12] : memref<32x128xbf16, #tpu.memory_space<vmem>>, vector<32x128xbf16>
    %cst_13 = arith.constant dense<0.000000e+00> : vector<8x128xf32>
    %15 = tpu.matmul %13, %14, %cst_13 {dimension_numbers = #tpu.dot_dimension_numbers<[1], [0], [0], [1], [0, 0, 1, 1], [], []>} : vector<8x32xbf16>, vector<32x128xbf16>, vector<8x128xf32> -> vector<8x128xf32>
    %16 = arith.addf %12, %15 : vector<8x128xf32>
    %c0_14 = arith.constant 0 : index
    %c0_15 = arith.constant 0 : index
    %17 = vector.load %arg8[%c0_14, %c0_15] : memref<8x128xf32, #tpu.memory_space<vmem>>, vector<8x128xf32>
    tpu.vector_store %arg8[%c0_14, %c0_15], %16 {strides = array<i32>} : memref<8x128xf32, #tpu.memory_space<vmem>>, vector<8x128xf32>,
    %c0_i32_16 = arith.constant 0 : i32
    %18 = arith.cmpi eq, %arg1, %c0_i32_16 : i32
    %19 = arith.extui %18 : i1 to i32
    %c0_i32_17 = arith.constant 0 : i32
    %20 = arith.cmpi ne, %19, %c0_i32_17 : i32
    scf.if %20 {
      %c0_18 = arith.constant 0 : index
      %c0_19 = arith.constant 0 : index
      %21 = vector.load %arg8[%c0_18, %c0_19] : memref<8x128xf32, #tpu.memory_space<vmem>>, vector<8x128xf32>
      %22 = math.tanh %21 : vector<8x128xf32>
      %23 = arith.truncf %22 : vector<8x128xf32> to vector<8x128xbf16>
      %c0_20 = arith.constant 0 : index
      %c0_21 = arith.constant 0 : index
      %c0_22 = arith.constant 0 : index
      %24 = vector.load %arg7[%c0_20, %c0_21, %c0_22] : memref<1x8x128xbf16, #tpu.memory_space<vmem>>, vector<1x8x128xbf16>
      %25 = vector.shape_cast %24 : vector<1x8x128xbf16> to vector<8x128xbf16>
      %26 = vector.shape_cast %23 : vector<8x128xbf16> to vector<1x8x128xbf16>
      tpu.vector_store %arg7[%c0_20, %c0_21, %c0_22], %26 {strides = array<i32>} : memref<1x8x128xbf16, #tpu.memory_space<vmem>>, vector<1x8x128xbf16>,
    } else {
    }
    return
  }
  func.func @transform_0(%arg0: i32, %arg1: i32) -> (i32, i32, i32) {
    %c0_i32 = arith.constant 0 : i32
    %c0_i32_0 = arith.constant 0 : i32
    %c0_i32_1 = arith.constant 0 : i32
    return %arg0, %c0_i32, %c0_i32_0 : i32, i32, i32
  }
  func.func @transform_1(%arg0: i32, %arg1: i32) -> (i32, i32, i32) {
    %c0_i32 = arith.constant 0 : i32
    %c0_i32_0 = arith.constant 0 : i32
    return %arg0, %c0_i32, %arg1 : i32, i32, i32
  }
  func.func @transform_2(%arg0: i32, %arg1: i32) -> (i32, i32, i32) {
    %c0_i32 = arith.constant 0 : i32
    %c0_i32_0 = arith.constant 0 : i32
    %c0_i32_1 = arith.constant 0 : i32
    return %arg0, %c0_i32, %c0_i32_0 : i32, i32, i32
  }
  func.func @transform_3(%arg0: i32, %arg1: i32) -> (i32, i32) {
    %c0_i32 = arith.constant 0 : i32
    %c0_i32_0 = arith.constant 0 : i32
    return %arg1, %c0_i32 : i32, i32
  }
  func.func @transform_4(%arg0: i32, %arg1: i32) -> (i32, i32, i32) {
    %c0_i32 = arith.constant 0 : i32
    %c0_i32_0 = arith.constant 0 : i32
    %c0_i32_1 = arith.constant 0 : i32
    return %arg0, %c0_i32, %c0_i32_0 : i32, i32, i32
  }
  func.func @transform_5(%arg0: i32, %arg1: i32) -> (i32, i32, i32) {
    %c0_i32 = arith.constant 0 : i32
    %c0_i32_0 = arith.constant 0 : i32
    %c0_i32_1 = arith.constant 0 : i32
    return %arg0, %c0_i32, %c0_i32_0 : i32, i32, i32
  }
}

module attributes {stable_mosaic.version = 11 : i64} {
  func.func @pred_head_kernel(%arg0: i32, %arg1: memref<8x128xbf16, #tpu.memory_space<vmem>>, %arg2: memref<8x128xbf16, #tpu.memory_space<vmem>>, %arg3: memref<128x128xbf16, #tpu.memory_space<vmem>>, %arg4: memref<128x128xbf16, #tpu.memory_space<vmem>>, %arg5: memref<128x128xbf16, #tpu.memory_space<vmem>>, %arg6: memref<128x128xbf16, #tpu.memory_space<vmem>>, %arg7: memref<1x128xf32, #tpu.memory_space<vmem>>, %arg8: memref<128x128xbf16, #tpu.memory_space<vmem>>, %arg9: memref<1x128xf32, #tpu.memory_space<vmem>>, %arg10: memref<8x128xf32, #tpu.memory_space<vmem>>) attributes {dimension_semantics = [#tpu.dimension_semantics<parallel>], iteration_bounds = array<i64: 1>, scalar_prefetch = 0 : i64, scratch_operands = 0 : i64, tpu.core_type = #tpu.core_type<tc>, window_params = [{transform_indices = @transform_0, window_bounds = array<i64: 8, 128>}, {transform_indices = @transform_1, window_bounds = array<i64: 8, 128>}, {pipeline_mode = #tpu.pipeline_mode<synchronous>, transform_indices = @transform_2, window_bounds = array<i64: 128, 128>}, {pipeline_mode = #tpu.pipeline_mode<synchronous>, transform_indices = @transform_3, window_bounds = array<i64: 128, 128>}, {pipeline_mode = #tpu.pipeline_mode<synchronous>, transform_indices = @transform_4, window_bounds = array<i64: 128, 128>}, {pipeline_mode = #tpu.pipeline_mode<synchronous>, transform_indices = @transform_5, window_bounds = array<i64: 128, 128>}, {pipeline_mode = #tpu.pipeline_mode<synchronous>, transform_indices = @transform_6, window_bounds = array<i64: 1, 128>}, {pipeline_mode = #tpu.pipeline_mode<synchronous>, transform_indices = @transform_7, window_bounds = array<i64: 128, 128>}, {pipeline_mode = #tpu.pipeline_mode<synchronous>, transform_indices = @transform_8, window_bounds = array<i64: 1, 128>}, {transform_indices = @transform_9, window_bounds = array<i64: 8, 128>}]} {
    %c0 = arith.constant 0 : index
    %c0_0 = arith.constant 0 : index
    %0 = vector.load %arg1[%c0, %c0_0] : memref<8x128xbf16, #tpu.memory_space<vmem>>, vector<8x128xbf16>
    %c0_1 = arith.constant 0 : index
    %c0_2 = arith.constant 0 : index
    %1 = vector.load %arg2[%c0_1, %c0_2] : memref<8x128xbf16, #tpu.memory_space<vmem>>, vector<8x128xbf16>
    %c0_3 = arith.constant 0 : index
    %c0_4 = arith.constant 0 : index
    %2 = vector.load %arg3[%c0_3, %c0_4] : memref<128x128xbf16, #tpu.memory_space<vmem>>, vector<128x128xbf16>
    %cst = arith.constant dense<0.000000e+00> : vector<8x128xf32>
    %3 = tpu.matmul %0, %2, %cst {dimension_numbers = #tpu.dot_dimension_numbers<[1], [0], [0], [1], [0, 0, 1, 1], [], []>} : vector<8x128xbf16>, vector<128x128xbf16>, vector<8x128xf32> -> vector<8x128xf32>
    %c0_5 = arith.constant 0 : index
    %c0_6 = arith.constant 0 : index
    %4 = vector.load %arg4[%c0_5, %c0_6] : memref<128x128xbf16, #tpu.memory_space<vmem>>, vector<128x128xbf16>
    %cst_7 = arith.constant dense<0.000000e+00> : vector<8x128xf32>
    %5 = tpu.matmul %1, %4, %cst_7 {dimension_numbers = #tpu.dot_dimension_numbers<[1], [0], [0], [1], [0, 0, 1, 1], [], []>} : vector<8x128xbf16>, vector<128x128xbf16>, vector<8x128xf32> -> vector<8x128xf32>
    %6 = arith.addf %3, %5 : vector<8x128xf32>
    %7 = arith.subf %0, %1 : vector<8x128xbf16>
    %8 = math.absf %7 : vector<8x128xbf16>
    %c0_8 = arith.constant 0 : index
    %c0_9 = arith.constant 0 : index
    %9 = vector.load %arg5[%c0_8, %c0_9] : memref<128x128xbf16, #tpu.memory_space<vmem>>, vector<128x128xbf16>
    %cst_10 = arith.constant dense<0.000000e+00> : vector<8x128xf32>
    %10 = tpu.matmul %8, %9, %cst_10 {dimension_numbers = #tpu.dot_dimension_numbers<[1], [0], [0], [1], [0, 0, 1, 1], [], []>} : vector<8x128xbf16>, vector<128x128xbf16>, vector<8x128xf32> -> vector<8x128xf32>
    %11 = arith.addf %6, %10 : vector<8x128xf32>
    %12 = arith.mulf %0, %1 : vector<8x128xbf16>
    %c0_11 = arith.constant 0 : index
    %c0_12 = arith.constant 0 : index
    %13 = vector.load %arg6[%c0_11, %c0_12] : memref<128x128xbf16, #tpu.memory_space<vmem>>, vector<128x128xbf16>
    %cst_13 = arith.constant dense<0.000000e+00> : vector<8x128xf32>
    %14 = tpu.matmul %12, %13, %cst_13 {dimension_numbers = #tpu.dot_dimension_numbers<[1], [0], [0], [1], [0, 0, 1, 1], [], []>} : vector<8x128xbf16>, vector<128x128xbf16>, vector<8x128xf32> -> vector<8x128xf32>
    %15 = arith.addf %11, %14 : vector<8x128xf32>
    %c0_14 = arith.constant 0 : index
    %c0_15 = arith.constant 0 : index
    %16 = vector.load %arg7[%c0_14, %c0_15] : memref<1x128xf32, #tpu.memory_space<vmem>>, vector<1x128xf32>
    %17 = vector.broadcast %16 : vector<1x128xf32> to vector<8x128xf32>
    %18 = arith.addf %15, %17 : vector<8x128xf32>
    %cst_16 = arith.constant 0.000000e+00 : f32
    %19 = vector.broadcast %cst_16 : f32 to vector<8x128xf32>
    %20 = arith.maximumf %18, %19 : vector<8x128xf32>
    %21 = arith.truncf %20 : vector<8x128xf32> to vector<8x128xbf16>
    %c0_17 = arith.constant 0 : index
    %c0_18 = arith.constant 0 : index
    %22 = vector.load %arg8[%c0_17, %c0_18] : memref<128x128xbf16, #tpu.memory_space<vmem>>, vector<128x128xbf16>
    %cst_19 = arith.constant dense<0.000000e+00> : vector<8x128xf32>
    %23 = tpu.matmul %21, %22, %cst_19 {dimension_numbers = #tpu.dot_dimension_numbers<[1], [0], [0], [1], [0, 0, 1, 1], [], []>} : vector<8x128xbf16>, vector<128x128xbf16>, vector<8x128xf32> -> vector<8x128xf32>
    %c0_20 = arith.constant 0 : index
    %c0_21 = arith.constant 0 : index
    %24 = vector.load %arg9[%c0_20, %c0_21] : memref<1x128xf32, #tpu.memory_space<vmem>>, vector<1x128xf32>
    %25 = vector.broadcast %24 : vector<1x128xf32> to vector<8x128xf32>
    %26 = arith.addf %23, %25 : vector<8x128xf32>
    %c0_22 = arith.constant 0 : index
    %c0_23 = arith.constant 0 : index
    %27 = vector.load %arg10[%c0_22, %c0_23] : memref<8x128xf32, #tpu.memory_space<vmem>>, vector<8x128xf32>
    tpu.vector_store %arg10[%c0_22, %c0_23], %26 {strides = array<i32>} : memref<8x128xf32, #tpu.memory_space<vmem>>, vector<8x128xf32>,
    return
  }
  func.func @transform_0(%arg0: i32) -> (i32, i32) {
    %c0_i32 = arith.constant 0 : i32
    %c0_i32_0 = arith.constant 0 : i32
    return %arg0, %c0_i32 : i32, i32
  }
  func.func @transform_1(%arg0: i32) -> (i32, i32) {
    %c0_i32 = arith.constant 0 : i32
    %c0_i32_0 = arith.constant 0 : i32
    return %arg0, %c0_i32 : i32, i32
  }
  func.func @transform_2(%arg0: i32) -> (i32, i32) {
    %c0_i32 = arith.constant 0 : i32
    %c0_i32_0 = arith.constant 0 : i32
    %c0_i32_1 = arith.constant 0 : i32
    return %c0_i32, %c0_i32_0 : i32, i32
  }
  func.func @transform_3(%arg0: i32) -> (i32, i32) {
    %c0_i32 = arith.constant 0 : i32
    %c0_i32_0 = arith.constant 0 : i32
    %c0_i32_1 = arith.constant 0 : i32
    return %c0_i32, %c0_i32_0 : i32, i32
  }
  func.func @transform_4(%arg0: i32) -> (i32, i32) {
    %c0_i32 = arith.constant 0 : i32
    %c0_i32_0 = arith.constant 0 : i32
    %c0_i32_1 = arith.constant 0 : i32
    return %c0_i32, %c0_i32_0 : i32, i32
  }
  func.func @transform_5(%arg0: i32) -> (i32, i32) {
    %c0_i32 = arith.constant 0 : i32
    %c0_i32_0 = arith.constant 0 : i32
    %c0_i32_1 = arith.constant 0 : i32
    return %c0_i32, %c0_i32_0 : i32, i32
  }
  func.func @transform_6(%arg0: i32) -> (i32, i32) {
    %c0_i32 = arith.constant 0 : i32
    %c0_i32_0 = arith.constant 0 : i32
    %c0_i32_1 = arith.constant 0 : i32
    return %c0_i32, %c0_i32_0 : i32, i32
  }
  func.func @transform_7(%arg0: i32) -> (i32, i32) {
    %c0_i32 = arith.constant 0 : i32
    %c0_i32_0 = arith.constant 0 : i32
    %c0_i32_1 = arith.constant 0 : i32
    return %c0_i32, %c0_i32_0 : i32, i32
  }
  func.func @transform_8(%arg0: i32) -> (i32, i32) {
    %c0_i32 = arith.constant 0 : i32
    %c0_i32_0 = arith.constant 0 : i32
    %c0_i32_1 = arith.constant 0 : i32
    return %c0_i32, %c0_i32_0 : i32, i32
  }
  func.func @transform_9(%arg0: i32) -> (i32, i32) {
    %c0_i32 = arith.constant 0 : i32
    %c0_i32_0 = arith.constant 0 : i32
    return %arg0, %c0_i32 : i32, i32
  }
}

</mosaic_0001>

<llo_original>
// kernel: final_model_forward.2
$region0: #{final_model_forward.2}
  #allocation0 [shape = 'u32[]', space=smem, size = 0x4, offset = 0x4, fixed_abs, tag = 'smem constant byte address 0x4 - core index']
  #allocation1 [shape = 'u32[144,128]{1,0:T(1,128)}', space=vmem, size = 0x12000, scoped, tag = 'internal scratch']
  #allocation2 [shape = 'f32[8,128]{1,0:T(8,128)}', space=vmem, size = 0x1000, scoped, tag = 'scratch operand']
  %s0 = inlined_call_operand.vmem [shape: bf16[2,8,16], index: 0, kind: input, shape index: {}]
  %s1 = inlined_call_operand.vmem [shape: bf16[2,16,32], index: 1, kind: input, shape index: {}]
  %s2 = inlined_call_operand.vmem [shape: f32[2,8,1], index: 2, kind: input, shape index: {}]
  %s3 = inlined_call_operand.vmem [shape: bf16[32,128], index: 3, kind: input, shape index: {}]
  %s4 = inlined_call_operand.vmem [shape: f32[2,8,128], index: 4, kind: input, shape index: {}]
  %s5 = inlined_call_operand.vmem [shape: bf16[2,8,128], index: 5, kind: output, shape index: {}]
  %s6 = sld [smem:[#allocation0]]
  $region61: #{final_model_forward.2} parent=0
    _
  %s8 = ssub.s32 1, %s6
  %s9 = scalar_select 0, %s8, %s6
  loop: start=0, step=1, limit=4
  $region2: #{final_model_forward.2} parent=0 // loop_pre_header
    _
  $region3: #{final_model_forward.2} parent=0 // loop_header
    %s11 = sphi 0, %s15
    %p12 = scmp.ge.s32.totalorder %s11, 4
    %s18 = sphi 0, %s30
    %s19 = sphi 0, %s26
    %s20 = sphi 0, %s18
    %s21 = sphi 0, %s19
    %s22 = sphi 0, %s20
    %s23 = sphi 0, %s21
    %s33 = sphi 0, %s35
    %s36 = sphi 0, %s33
    %s37 = sphi 0, %s36
    %s53 = sphi 0, %s37
    %s61 = sphi 0, %s63
    %s64 = sphi 0, %s61
    %s65 = sphi 0, %s64
    %s81 = sphi 0, %s65
    %s87 = sphi 0, %s89
    %s90 = sphi 0, %s87
    %s91 = sphi 0, %s90
    %s107 = sphi 0, %s91
    %s113 = sphi 0, %s115
    %s116 = sphi 0, %s113
    %s117 = sphi 0, %s116
    %s133 = sphi 0, %s117
    %s139 = sphi 0, %s141
    %s142 = sphi 0, %s139
    %s143 = sphi 0, %s142
    %s159 = sphi 0, %s143
    %s165 = sphi 0, %s167
    %s168 = sphi 0, %s165
    %s169 = sphi 0, %s168
    %s185 = sphi 0, %s169
  $region4: #{final_model_forward.2} parent=0 // loop_header_branch
    %14 = sbr.rel (%p12) target = $region8
  $region5: #{final_model_forward.2} parent=0 // loop_body
    %s16 = ssub.s32 %s11, 1
    %s17 = ssub.s32 %s11, 2
    %s24 = sadd.s32 1, %s19
    %p25 = scmp.ge.s32.totalorder %s24, 1
    %s26 = scalar_select %p25, 0, %s24
    %s27 = sadd.s32 1, %s18
    %s28 = scalar_select %p25, %s27, %s18
    %p29 = scmp.ge.s32.totalorder %s28, 2
    %s30 = scalar_select %p29, 0, %s28
    %s31 = ssub.s32 %s18, %s30
    %p32 = scmp.eq.s32.totalorder %s31, 0
    %s34 = sadd.s32 %s33, 1
    %s35 = scalar_select %p32, %s33, %s34
    %p38 = pneg %p32
    %p39 = scmp.eq.s32.totalorder %s11, 1
    %p40 = por %p38, %p39
    %p41 = scmp.ne.s32.totalorder %s33, %s36
    %p42 = scmp.eq.s32.totalorder %s11, 0
    %p43 = por %p41, %p42
    %p44 = scmp.ne.s32.totalorder %s33, %s36
    %p45 = scmp.eq.s32.totalorder %s16, 1
    %p46 = por %p44, %p45
    %p47 = scmp.ne.s32.totalorder %s36, %s37
    %p48 = scmp.eq.s32.totalorder %s16, 0
    %p49 = por %p47, %p48
    %p50 = scmp.ne.s32.totalorder %s36, %s37
    %p51 = scmp.eq.s32.totalorder %s17, 1
    %p52 = por %p50, %p51
    %p54 = scmp.ne.s32.totalorder %s37, %s53
    %p55 = scmp.eq.s32.totalorder %s17, 0
    %p56 = por %p54, %p55
    %s57 = ssub.s32 %s18, %s30
    %s58 = ssub.s32 %s19, %s26
    %s59 = sor.u32 %s57, %s58
    %p60 = scmp.eq.s32.totalorder %s59, 0
    %s62 = sadd.s32 %s61, 1
    %s63 = scalar_select %p60, %s61, %s62
    %p66 = pneg %p60
    %p67 = scmp.eq.s32.totalorder %s11, 1
    %p68 = por %p66, %p67
    %p69 = scmp.ne.s32.totalorder %s61, %s64
    %p70 = scmp.eq.s32.totalorder %s11, 0
    %p71 = por %p69, %p70
    %p72 = scmp.ne.s32.totalorder %s61, %s64
    %p73 = scmp.eq.s32.totalorder %s16, 1
    %p74 = por %p72, %p73
    %p75 = scmp.ne.s32.totalorder %s64, %s65
    %p76 = scmp.eq.s32.totalorder %s16, 0
    %p77 = por %p75, %p76
    %p78 = scmp.ne.s32.totalorder %s64, %s65
    %p79 = scmp.eq.s32.totalorder %s17, 1
    %p80 = por %p78, %p79
    %p82 = scmp.ne.s32.totalorder %s65, %s81
    %p83 = scmp.eq.s32.totalorder %s17, 0
    %p84 = por %p82, %p83
    %s85 = ssub.s32 %s18, %s30
    %p86 = scmp.eq.s32.totalorder %s85, 0
    %s88 = sadd.s32 %s87, 1
    %s89 = scalar_select %p86, %s87, %s88
    %p92 = pneg %p86
    %p93 = scmp.eq.s32.totalorder %s11, 1
    %p94 = por %p92, %p93
    %p95 = scmp.ne.s32.totalorder %s87, %s90
    %p96 = scmp.eq.s32.totalorder %s11, 0
    %p97 = por %p95, %p96
    %p98 = scmp.ne.s32.totalorder %s87, %s90
    %p99 = scmp.eq.s32.totalorder %s16, 1
    %p100 = por %p98, %p99
    %p101 = scmp.ne.s32.totalorder %s90, %s91
    %p102 = scmp.eq.s32.totalorder %s16, 0
    %p103 = por %p101, %p102
    %p104 = scmp.ne.s32.totalorder %s90, %s91
    %p105 = scmp.eq.s32.totalorder %s17, 1
    %p106 = por %p104, %p105
    %p108 = scmp.ne.s32.totalorder %s91, %s107
    %p109 = scmp.eq.s32.totalorder %s17, 0
    %p110 = por %p108, %p109
    %s111 = ssub.s32 %s19, %s26
    %p112 = scmp.eq.s32.totalorder %s111, 0
    %s114 = sadd.s32 %s113, 1
    %s115 = scalar_select %p112, %s113, %s114
    %p118 = pneg %p112
    %p119 = scmp.eq.s32.totalorder %s11, 1
    %p120 = por %p118, %p119
    %p121 = scmp.ne.s32.totalorder %s113, %s116
    %p122 = scmp.eq.s32.totalorder %s11, 0
    %p123 = por %p121, %p122
    %p124 = scmp.ne.s32.totalorder %s113, %s116
    %p125 = scmp.eq.s32.totalorder %s16, 1
    %p126 = por %p124, %p125
    %p127 = scmp.ne.s32.totalorder %s116, %s117
    %p128 = scmp.eq.s32.totalorder %s16, 0
    %p129 = por %p127, %p128
    %p130 = scmp.ne.s32.totalorder %s116, %s117
    %p131 = scmp.eq.s32.totalorder %s17, 1
    %p132 = por %p130, %p131
    %p134 = scmp.ne.s32.totalorder %s117, %s133
    %p135 = scmp.eq.s32.totalorder %s17, 0
    %p136 = por %p134, %p135
    %s137 = ssub.s32 %s18, %s30
    %p138 = scmp.eq.s32.totalorder %s137, 0
    %s140 = sadd.s32 %s139, 1
    %s141 = scalar_select %p138, %s139, %s140
    %p144 = pneg %p138
    %p145 = scmp.eq.s32.totalorder %s11, 1
    %p146 = por %p144, %p145
    %p147 = scmp.ne.s32.totalorder %s139, %s142
    %p148 = scmp.eq.s32.totalorder %s11, 0
    %p149 = por %p147, %p148
    %p150 = scmp.ne.s32.totalorder %s139, %s142
    %p151 = scmp.eq.s32.totalorder %s16, 1
    %p152 = por %p150, %p151
    %p153 = scmp.ne.s32.totalorder %s142, %s143
    %p154 = scmp.eq.s32.totalorder %s16, 0
    %p155 = por %p153, %p154
    %p156 = scmp.ne.s32.totalorder %s142, %s143
    %p157 = scmp.eq.s32.totalorder %s17, 1
    %p158 = por %p156, %p157
    %p160 = scmp.ne.s32.totalorder %s143, %s159
    %p161 = scmp.eq.s32.totalorder %s17, 0
    %p162 = por %p160, %p161
    %s163 = ssub.s32 %s18, %s30
    %p164 = scmp.eq.s32.totalorder %s163, 0
    %s166 = sadd.s32 %s165, 1
    %s167 = scalar_select %p164, %s165, %s166
    %p170 = pneg %p164
    %p171 = scmp.eq.s32.totalorder %s11, 1
    %p172 = por %p170, %p171
    %p173 = scmp.ne.s32.totalorder %s165, %s168
    %p174 = scmp.eq.s32.totalorder %s11, 0
    %p175 = por %p173, %p174
    %p176 = scmp.ne.s32.totalorder %s165, %s168
    %p177 = scmp.eq.s32.totalorder %s16, 1
    %p178 = por %p176, %p177
    %p179 = scmp.ne.s32.totalorder %s168, %s169
    %p180 = scmp.eq.s32.totalorder %s16, 0
    %p181 = por %p179, %p180
    %p182 = scmp.ne.s32.totalorder %s168, %s169
    %p183 = scmp.eq.s32.totalorder %s17, 1
    %p184 = por %p182, %p183
    %p186 = scmp.ne.s32.totalorder %s169, %s185
    %p187 = scmp.eq.s32.totalorder %s17, 0
    %p188 = por %p186, %p187
    %p189 = scmp.le.s32.totalorder 1, %s11
    %p190 = scmp.lt.s32.totalorder %s11, 3
    %p191 = pnand %p189, %p190
    %p192 = pneg %p191
    // Predicated region
    $region9: #{final_model_forward.2} parent=5 // pred_check
      _
    $region10: #{final_model_forward.2} parent=5 // pred_check_branch
      %194 = sbr.rel (%p191) target = $region12
    $region11: #{final_model_forward.2} parent=5 // pred_region
      %s195 = ssub.s32 %s11, 1
      // Predicated region
      $region13: #{final_model_forward.2} parent=11 // pred_check
        %p196 = pneg %p129
      $region14: #{final_model_forward.2} parent=11 // pred_check_branch
        %198 = sbr.rel (%p196) target = $region16
      $region15: #{final_model_forward.2} parent=11 // pred_region
        %s199 = smul.u32 4, %s21
        %p200 = scmp.lt.s32.totalorder %s199, 3
        %s201 = scalar_select %p200, %s199, 3
        %s202 = smul.addr %s201, 4
        %s203 = scalar_lea.vmem %s3, %s202
        %s204 = smul.u32 4, %s21
      $region16: #{final_model_forward.2} parent=11 // pred_fallthru
        _
    $region12: #{final_model_forward.2} parent=5 // pred_fallthru
      _
    %p205 = scmp.lt.s32.totalorder %s11, 2
    // Predicated region
    $region17: #{final_model_forward.2} parent=5 // pred_check
      %p206 = pneg %p205
    $region18: #{final_model_forward.2} parent=5 // pred_check_branch
      %208 = sbr.rel (%p206) target = $region20
    $region19: #{final_model_forward.2} parent=5 // pred_region
      // Predicated region
      $region21: #{final_model_forward.2} parent=19 // pred_check
        %p209 = pneg %p43
      $region22: #{final_model_forward.2} parent=19 // pred_check_branch
        %211 = sbr.rel (%p209) target = $region24
      $region23: #{final_model_forward.2} parent=19 // pred_region
        %p212 = scmp.lt.s32.totalorder %s18, 1
        %s213 = scalar_select %p212, %s18, 1
        %s214 = smul.addr %s213, 4
        %s215 = scalar_lea.vmem %s0, %s214
      $region24: #{final_model_forward.2} parent=19 // pred_fallthru
        _
      // Predicated region
      $region25: #{final_model_forward.2} parent=19 // pred_check
        %p216 = pneg %p71
      $region26: #{final_model_forward.2} parent=19 // pred_check_branch
        %218 = sbr.rel (%p216) target = $region28
      $region27: #{final_model_forward.2} parent=19 // pred_region
        %p219 = scmp.lt.s32.totalorder %s18, 1
        %s220 = scalar_select %p219, %s18, 1
        %p221 = scmp.lt.s32.totalorder %s19, 0
        %s222 = scalar_select %p221, %s19, 0
        %s223 = smul.addr %s220, 2
        %s224 = sadd.s32 %s222, %s223
        %s225 = smul.addr %s224, 4
        %s226 = scalar_lea.vmem %s1, %s225
      $region28: #{final_model_forward.2} parent=19 // pred_fallthru
        _
      // Predicated region
      $region29: #{final_model_forward.2} parent=19 // pred_check
        %p227 = pneg %p97
      $region30: #{final_model_forward.2} parent=19 // pred_check_branch
        %229 = sbr.rel (%p227) target = $region32
      $region31: #{final_model_forward.2} parent=19 // pred_region
        %p230 = scmp.lt.s32.totalorder %s18, 1
        %s231 = scalar_select %p230, %s18, 1
        %s232 = smul.addr %s231, 8
        %s233 = scalar_lea.vmem %s2, %s232
      $region32: #{final_model_forward.2} parent=19 // pred_fallthru
        _
      // Predicated region
      $region33: #{final_model_forward.2} parent=19 // pred_check
        %p234 = pneg %p149
      $region34: #{final_model_forward.2} parent=19 // pred_check_branch
        %236 = sbr.rel (%p234) target = $region36
      $region35: #{final_model_forward.2} parent=19 // pred_region
        %p237 = scmp.lt.s32.totalorder %s18, 1
        %s238 = scalar_select %p237, %s18, 1
        %s239 = smul.addr %s238, 8
        %s240 = scalar_lea.vmem %s4, %s239
      $region36: #{final_model_forward.2} parent=19 // pred_fallthru
        _
    $region20: #{final_model_forward.2} parent=5 // pred_fallthru
      _
    %p241 = scmp.le.s32.totalorder 1, %s11
    %p242 = scmp.lt.s32.totalorder %s11, 3
    %p243 = pnand %p241, %p242
    %p244 = pneg %p243
    // Predicated region
    $region37: #{final_model_forward.2} parent=5 // pred_check
      _
    $region38: #{final_model_forward.2} parent=5 // pred_check_branch
      %246 = sbr.rel (%p243) target = $region40
    $region39: #{final_model_forward.2} parent=5 // pred_region
      %s247 = ssub.s32 %s11, 1
      %p248 = scmp.lt.s32.totalorder %s20, 1
      %s249 = scalar_select %p248, %s20, 1
      %s250 = smul.addr %s249, 4
      %s251 = scalar_lea.vmem %s0, %s250
      %p252 = pneg %p49
      %p253 = pneg %p46
      %p254 = scmp.lt.s32.totalorder %s20, 1
      %s255 = scalar_select %p254, %s20, 1
      %p256 = scmp.lt.s32.totalorder %s21, 0
      %s257 = scalar_select %p256, %s21, 0
      %s258 = smul.addr %s255, 2
      %s259 = sadd.s32 %s257, %s258
      %s260 = smul.addr %s259, 4
      %s261 = scalar_lea.vmem %s1, %s260
      %p262 = pneg %p77
      %p263 = pneg %p74
      %p264 = scmp.lt.s32.totalorder %s20, 1
      %s265 = scalar_select %p264, %s20, 1
      %s266 = smul.addr %s265, 8
      %s267 = scalar_lea.vmem %s2, %s266
      %p268 = pneg %p103
      %p269 = pneg %p100
      %s270 = smul.u32 4, %s21
      %p271 = scmp.lt.s32.totalorder %s270, 3
      %s272 = scalar_select %p271, %s270, 3
      %s273 = smul.addr %s272, 4
      %s274 = scalar_lea.vmem %s3, %s273
      %p275 = pneg %p129
      %p276 = pneg %p126
      %p277 = scmp.lt.s32.totalorder %s20, 1
      %s278 = scalar_select %p277, %s20, 1
      %s279 = smul.addr %s278, 8
      %s280 = scalar_lea.vmem %s4, %s279
      %p281 = pneg %p155
      %p282 = pneg %p152
      %p283 = pneg %p181
      %p284 = pneg %p178
      %p285 = scmp.lt.s32.totalorder %s20, 1
      %s286 = scalar_select %p285, %s20, 1
      %s287 = smul.addr %s286, 4
      %s288 = scalar_lea.vmem %s5, %s287
      %p289 = scmp.lt.s32.totalorder %s20, 1
      %s290 = scalar_select %p289, %s20, 1
      %s291 = smul.addr %s290, 4
      %s292 = scalar_lea.vmem %s0, %s291
      %p293 = scmp.lt.s32.totalorder %s20, 1
      %s294 = scalar_select %p293, %s20, 1
      %p295 = scmp.lt.s32.totalorder %s21, 0
      %s296 = scalar_select %p295, %s21, 0
      %s297 = smul.addr %s294, 2
      %s298 = sadd.s32 %s296, %s297
      %s299 = smul.addr %s298, 4
      %s300 = scalar_lea.vmem %s1, %s299
      %p301 = scmp.lt.s32.totalorder %s20, 1
      %s302 = scalar_select %p301, %s20, 1
      %s303 = smul.addr %s302, 8
      %s304 = scalar_lea.vmem %s2, %s303
      %s305 = smul.u32 4, %s21
      %p306 = scmp.lt.s32.totalorder %s305, 3
      %s307 = scalar_select %p306, %s305, 3
      %s308 = smul.addr %s307, 4
      %s309 = scalar_lea.vmem %s3, %s308
      %s310 = smul.u32 4, %s21
      %p311 = scmp.lt.s32.totalorder %s20, 1
      %s312 = scalar_select %p311, %s20, 1
      %s313 = smul.addr %s312, 8
      %s314 = scalar_lea.vmem %s4, %s313
      %p315 = scmp.lt.s32.totalorder %s20, 1
      %s316 = scalar_select %p315, %s20, 1
      %s317 = smul.addr %s316, 4
      %s318 = scalar_lea.vmem %s5, %s317
      %p320 = scmp.eq.s32.totalorder %s21, 0
      // Predicated region
      $region41: #{final_model_forward.2} parent=39 // pred_check
        %p321 = pneg %p320
      $region42: #{final_model_forward.2} parent=39 // pred_check_branch
        %323 = sbr.rel (%p321) target = $region44
      $region43: #{final_model_forward.2} parent=39 // pred_region
        %v324 = vld [vmem:[%s314] sm:$0xff]
        %325 = vst [vmem:[#allocation2] sm:$0xff] %v324
      $region44: #{final_model_forward.2} parent=39 // pred_fallthru
        _
      %v326 = vld [vmem:[%s292] sm:$0xf]
      %v327 = vld [vmem:[%s300] sm:$0xf]
      %v328 = vld [vmem:[%s300 + $0x4] sm:$0xf]
      %v331 = vunpack.c.l.b16 %v327
      %v332 = vunpack.c.l.b16 %v328
      %v333 = vpack.c.b16 %v332, %v331
      %vm335 = vcmask 130048
      %v337 = vsel %vm335, %v326, 0
      %339 = vmatprep.subr.bf16.mxu0 0
      %340 = vmatpush1.bf16.msra.mxu0 %v333
      %341 = vmatprep.subr.bf16.mxu0 0
      %342 = vmatpush1.bf16.msra.mxu0 0
      %343 = vmatprep.subr.bf16.mxu0 0
      %344 = vmatpush1.bf16.msra.mxu0 0
      %345 = vmatprep.subr.bf16.mxu0 0
      %346 = vmatpush1.bf16.msra.mxu0 0
      %347 = vmatprep.subr.bf16.mxu0 0
      %348 = vmatpush1.bf16.msra.mxu0 0
      %349 = vmatprep.subr.bf16.mxu0 0
      %350 = vmatpush1.bf16.msra.mxu0 0
      %351 = vmatprep.subr.bf16.mxu0 0
      %352 = vmatpush1.bf16.msra.mxu0 0
      %353 = vmatprep.subr.bf16.mxu0 0
      %354 = vmatpush1.bf16.msra.mxu0 0
      %355 = vmatprep.subr.bf16.mxu0 0
      %356 = vmatpush1.bf16.msra.mxu0 0
      %357 = vmatprep.subr.bf16.mxu0 0
      %358 = vmatpush1.bf16.msra.mxu0 0
      %359 = vmatprep.subr.bf16.mxu0 0
      %360 = vmatpush1.bf16.msra.mxu0 0
      %361 = vmatprep.subr.bf16.mxu0 0
      %362 = vmatpush1.bf16.msra.mxu0 0
      %363 = vmatprep.subr.bf16.mxu0 0
      %364 = vmatpush1.bf16.msra.mxu0 0
      %365 = vmatprep.subr.bf16.mxu0 0
      %366 = vmatpush1.bf16.msra.mxu0 0
      %367 = vmatprep.subr.bf16.mxu0 0
      %368 = vmatpush1.bf16.msra.mxu0 0
      %369 = vmatprep.subr.bf16.mxu0 0
      %370 = vmatpush1.bf16.msra.mxu0 0
      %371 = vmatprep.mubr.bf16.mxu0 0
      %372 = vmatmul.mubr.bf16.gmra.mrb[0].mxu0 %v337
      %v373 = vpop.f32.mrb[0].mxu0
      %v374 = vadd.f32 0.0, %v373
      %v375 = vpop.f32.mrb[0].mxu0
      %v376 = vpop.f32.mrb[0].mxu0
      %v377 = vpop.f32.mrb[0].mxu0
      %378 = vdwg.mxu0
      %v379 = vld [vmem:[%s304] sm:$0xff]
      %381 = vset.pattern.permute.xlu0 0
      %382 = vperm.xlu0 %381, %v379
      %v383 = vpop.permute.xlu0 %382
      %v385 = vmul.f32 %v374, %v383
      %v386 = vld [vmem:[#allocation2] sm:$0xff]
      %v387 = vpack.c.bf16 %v385, %v385
      %v388 = vld [vmem:[%s309] sm:$0xf]
      %v389 = vld [vmem:[%s309 + $0x4] sm:$0xf]
      %v390 = vld [vmem:[%s309 + $0x8] sm:$0xf]
      %v391 = vld [vmem:[%s309 + $0xc] sm:$0xf]
      %v396 = vunpack.c.l.b16 %v388
      %v397 = vunpack.c.l.b16 %v389
      %v398 = vunpack.c.l.b16 %v390
      %v399 = vunpack.c.l.b16 %v391
      %v400 = vpack.c.b16 %v397, %v396
      %v401 = vpack.c.b16 %v399, %v398
      %vm404 = vcmask 261120
      %v406 = vsel %vm404, %v387, 0
      %408 = vmatprep.subr.bf16.mxu0 0
      %409 = vmatpush1.bf16.msra.mxu0 %v400
      %410 = vmatprep.subr.bf16.mxu0 0
      %411 = vmatpush1.bf16.msra.mxu0 %v401
      %412 = vmatprep.subr.bf16.mxu0 0
      %413 = vmatpush1.bf16.msra.mxu0 0
      %414 = vmatprep.subr.bf16.mxu0 0
      %415 = vmatpush1.bf16.msra.mxu0 0
      %416 = vmatprep.subr.bf16.mxu0 0
      %417 = vmatpush1.bf16.msra.mxu0 0
      %418 = vmatprep.subr.bf16.mxu0 0
      %419 = vmatpush1.bf16.msra.mxu0 0
      %420 = vmatprep.subr.bf16.mxu0 0
      %421 = vmatpush1.bf16.msra.mxu0 0
      %422 = vmatprep.subr.bf16.mxu0 0
      %423 = vmatpush1.bf16.msra.mxu0 0
      %424 = vmatprep.subr.bf16.mxu0 0
      %425 = vmatpush1.bf16.msra.mxu0 0
      %426 = vmatprep.subr.bf16.mxu0 0
      %427 = vmatpush1.bf16.msra.mxu0 0
      %428 = vmatprep.subr.bf16.mxu0 0
      %429 = vmatpush1.bf16.msra.mxu0 0
      %430 = vmatprep.subr.bf16.mxu0 0
      %431 = vmatpush1.bf16.msra.mxu0 0
      %432 = vmatprep.subr.bf16.mxu0 0
      %433 = vmatpush1.bf16.msra.mxu0 0
      %434 = vmatprep.subr.bf16.mxu0 0
      %435 = vmatpush1.bf16.msra.mxu0 0
      %436 = vmatprep.subr.bf16.mxu0 0
      %437 = vmatpush1.bf16.msra.mxu0 0
      %438 = vmatprep.subr.bf16.mxu0 0
      %439 = vmatpush1.bf16.msra.mxu0 0
      %440 = vmatprep.mubr.bf16.mxu0 0
      %441 = vmatmul.mubr.bf16.gmra.mrb[0].mxu0 %v406
      %v442 = vpop.f32.mrb[0].mxu0
      %v443 = vadd.f32 0.0, %v442
      %v444 = vpop.f32.mrb[0].mxu0
      %v445 = vpop.f32.mrb[0].mxu0
      %v446 = vpop.f32.mrb[0].mxu0
      %447 = vdwg.mxu0
      %v448 = vadd.f32 %v386, %v443
      %449 = vst [vmem:[#allocation2] sm:$0xff] %v448
      // Predicated region
      $region45: #{final_model_forward.2} parent=39 // pred_check
        %p450 = pneg %p320
      $region46: #{final_model_forward.2} parent=39 // pred_check_branch
        %452 = sbr.rel (%p450) target = $region48
      $region47: #{final_model_forward.2} parent=39 // pred_region
        %v453 = vld [vmem:[#allocation2] sm:$0xff]
        %v454 = vtanh.pop %v453
        %v455 = vpack.c.bf16 %v454, %v454
        %456 = vst [vmem:[%s318] sm:$0xf] %v455
      $region48: #{final_model_forward.2} parent=39 // pred_fallthru
        _
      %p457 = scmp.lt.s32.totalorder %s20, 1
      %s458 = scalar_select %p457, %s20, 1
      %s459 = smul.addr %s458, 4
      %s460 = scalar_lea.vmem %s5, %s459
      // Predicated region
      $region49: #{final_model_forward.2} parent=39 // pred_check
        %p461 = pneg %p178
      $region50: #{final_model_forward.2} parent=39 // pred_check_branch
        %463 = sbr.rel (%p461) target = $region52
      $region51: #{final_model_forward.2} parent=39 // pred_region
        _
      $region52: #{final_model_forward.2} parent=39 // pred_fallthru
        _
    $region40: #{final_model_forward.2} parent=5 // pred_fallthru
      _
    %p464 = scmp.le.s32.totalorder 2, %s11
    // Predicated region
    $region53: #{final_model_forward.2} parent=5 // pred_check
      %p465 = pneg %p464
    $region54: #{final_model_forward.2} parent=5 // pred_check_branch
      %467 = sbr.rel (%p465) target = $region56
    $region55: #{final_model_forward.2} parent=5 // pred_region
      %s468 = ssub.s32 %s11, 2
      // Predicated region
      $region57: #{final_model_forward.2} parent=55 // pred_check
        %p469 = pneg %p184
      $region58: #{final_model_forward.2} parent=55 // pred_check_branch
        %471 = sbr.rel (%p469) target = $region60
      $region59: #{final_model_forward.2} parent=55 // pred_region
        %p472 = scmp.lt.s32.totalorder %s22, 1
        %s473 = scalar_select %p472, %s22, 1
        %s474 = smul.addr %s473, 4
        %s475 = scalar_lea.vmem %s5, %s474
      $region60: #{final_model_forward.2} parent=55 // pred_fallthru
        _
    $region56: #{final_model_forward.2} parent=5 // pred_fallthru
      _
  $region6: #{final_model_forward.2} parent=0 // loop_footer
    %s15 = sadd.s32 1, %s11
  $region7: #{final_model_forward.2} parent=0 // loop_footer_branch
    %10 = sbr.rel target = $region3
  $region8: #{final_model_forward.2} parent=0 // loop_exit
    _

// kernel: final_model_forward.3
$region0: #{final_model_forward.3}
  #allocation0 [shape = 'u32[]', space=smem, size = 0x4, offset = 0x4, fixed_abs, tag = 'smem constant byte address 0x4 - core index']
  #allocation1 [shape = 'u32[144,128]{1,0:T(1,128)}', space=vmem, size = 0x12000, scoped, tag = 'internal scratch']
  %s0 = inlined_call_operand.vmem [shape: bf16[8,128], index: 0, kind: input, shape index: {}]
  %s1 = inlined_call_operand.vmem [shape: bf16[8,128], index: 1, kind: input, shape index: {}]
  %s2 = inlined_call_operand.vmem [shape: bf16[128,128], index: 2, kind: input, shape index: {}]
  %s3 = inlined_call_operand.vmem [shape: bf16[128,128], index: 3, kind: input, shape index: {}]
  %s4 = inlined_call_operand.vmem [shape: bf16[128,128], index: 4, kind: input, shape index: {}]
  %s5 = inlined_call_operand.vmem [shape: bf16[128,128], index: 5, kind: input, shape index: {}]
  %s6 = inlined_call_operand.vmem [shape: f32[1,128], index: 6, kind: input, shape index: {}]
  %s7 = inlined_call_operand.vmem [shape: bf16[128,128], index: 7, kind: input, shape index: {}]
  %s8 = inlined_call_operand.vmem [shape: f32[1,128], index: 8, kind: input, shape index: {}]
  %s9 = inlined_call_operand.hbm [shape: f32[8,128], index: 9, kind: output, shape index: {}]
  %s10 = sld [smem:[#allocation0]]
  $region46: #{final_model_forward.3} parent=0
    _
  %s12 = ssub.s32 1, %s10
  %s13 = scalar_select 0, %s12, %s10
  $region1: #{final_model_forward.3} parent=0
    #allocation2 [shape = 'u8[4096]{0}', space=vmem, size = 0x1000, scoped, tag = 'output window, operand 0, single buffered']
    #allocation3 [shape = 's32[1]{0}', space=sflag, size = 0x4, scoped, tag = 'scoped memory for final_model_forward.3']
    %14 = vsyncpa [#allocation3], 0
    // Predicated region
    $region2: #{final_model_forward.3} parent=1 // pred_check
      _
    $region3: #{final_model_forward.3} parent=1 // pred_check_branch
      %16 = sbr.rel (0) target = $region5
    $region4: #{final_model_forward.3} parent=1 // pred_region
      _
    $region5: #{final_model_forward.3} parent=1 // pred_fallthru
      _
    // Predicated region
    $region6: #{final_model_forward.3} parent=1 // pred_check
      _
    $region7: #{final_model_forward.3} parent=1 // pred_check_branch
      %18 = sbr.rel (0) target = $region9
    $region8: #{final_model_forward.3} parent=1 // pred_region
      _
    $region9: #{final_model_forward.3} parent=1 // pred_fallthru
      _
    // Predicated region
    $region10: #{final_model_forward.3} parent=1 // pred_check
      _
    $region11: #{final_model_forward.3} parent=1 // pred_check_branch
      %20 = sbr.rel (0) target = $region13
    $region12: #{final_model_forward.3} parent=1 // pred_region
      _
    $region13: #{final_model_forward.3} parent=1 // pred_fallthru
      _
    // Predicated region
    $region14: #{final_model_forward.3} parent=1 // pred_check
      _
    $region15: #{final_model_forward.3} parent=1 // pred_check_branch
      %22 = sbr.rel (0) target = $region17
    $region16: #{final_model_forward.3} parent=1 // pred_region
      _
    $region17: #{final_model_forward.3} parent=1 // pred_fallthru
      _
    // Predicated region
    $region18: #{final_model_forward.3} parent=1 // pred_check
      _
    $region19: #{final_model_forward.3} parent=1 // pred_check_branch
      %24 = sbr.rel (0) target = $region21
    $region20: #{final_model_forward.3} parent=1 // pred_region
      _
    $region21: #{final_model_forward.3} parent=1 // pred_fallthru
      _
    // Predicated region
    $region22: #{final_model_forward.3} parent=1 // pred_check
      _
    $region23: #{final_model_forward.3} parent=1 // pred_check_branch
      %26 = sbr.rel (0) target = $region25
    $region24: #{final_model_forward.3} parent=1 // pred_region
      _
    $region25: #{final_model_forward.3} parent=1 // pred_fallthru
      _
    // Predicated region
    $region26: #{final_model_forward.3} parent=1 // pred_check
      _
    $region27: #{final_model_forward.3} parent=1 // pred_check_branch
      %28 = sbr.rel (0) target = $region29
    $region28: #{final_model_forward.3} parent=1 // pred_region
      _
    $region29: #{final_model_forward.3} parent=1 // pred_fallthru
      _
    // Predicated region
    $region30: #{final_model_forward.3} parent=1 // pred_check
      _
    $region31: #{final_model_forward.3} parent=1 // pred_check_branch
      %30 = sbr.rel (0) target = $region33
    $region32: #{final_model_forward.3} parent=1 // pred_region
      _
    $region33: #{final_model_forward.3} parent=1 // pred_fallthru
      _
    // Predicated region
    $region34: #{final_model_forward.3} parent=1 // pred_check
      _
    $region35: #{final_model_forward.3} parent=1 // pred_check_branch
      %32 = sbr.rel (0) target = $region37
    $region36: #{final_model_forward.3} parent=1 // pred_region
      _
    $region37: #{final_model_forward.3} parent=1 // pred_fallthru
      _
    %v34 = vld [vmem:[%s0] sm:$0xf]
    %v35 = vld [vmem:[%s1] sm:$0xf]
    %v36 = vld [vmem:[%s2] sm:$0xf]
    %v37 = vld [vmem:[%s2 + $0x4] sm:$0xf]
    %v38 = vld [vmem:[%s2 + $0x8] sm:$0xf]
    %v39 = vld [vmem:[%s2 + $0xc] sm:$0xf]
    %v40 = vld [vmem:[%s2 + $0x10] sm:$0xf]
    %v41 = vld [vmem:[%s2 + $0x14] sm:$0xf]
    %v42 = vld [vmem:[%s2 + $0x18] sm:$0xf]
    %v43 = vld [vmem:[%s2 + $0x1c] sm:$0xf]
    %v44 = vld [vmem:[%s2 + $0x20] sm:$0xf]
    %v45 = vld [vmem:[%s2 + $0x24] sm:$0xf]
    %v46 = vld [vmem:[%s2 + $0x28] sm:$0xf]
    %v47 = vld [vmem:[%s2 + $0x2c] sm:$0xf]
    %v48 = vld [vmem:[%s2 + $0x30] sm:$0xf]
    %v49 = vld [vmem:[%s2 + $0x34] sm:$0xf]
    %v50 = vld [vmem:[%s2 + $0x38] sm:$0xf]
    %v51 = vld [vmem:[%s2 + $0x3c] sm:$0xf]
    %v52 = vld [vmem:[%s3] sm:$0xf]
    %v53 = vld [vmem:[%s3 + $0x4] sm:$0xf]
    %v54 = vld [vmem:[%s3 + $0x8] sm:$0xf]
    %v55 = vld [vmem:[%s3 + $0xc] sm:$0xf]
    %v56 = vld [vmem:[%s3 + $0x10] sm:$0xf]
    %v57 = vld [vmem:[%s3 + $0x14] sm:$0xf]
    %v58 = vld [vmem:[%s3 + $0x18] sm:$0xf]
    %v59 = vld [vmem:[%s3 + $0x1c] sm:$0xf]
    %v60 = vld [vmem:[%s3 + $0x20] sm:$0xf]
    %v61 = vld [vmem:[%s3 + $0x24] sm:$0xf]
    %v62 = vld [vmem:[%s3 + $0x28] sm:$0xf]
    %v63 = vld [vmem:[%s3 + $0x2c] sm:$0xf]
    %v64 = vld [vmem:[%s3 + $0x30] sm:$0xf]
    %v65 = vld [vmem:[%s3 + $0x34] sm:$0xf]
    %v66 = vld [vmem:[%s3 + $0x38] sm:$0xf]
    %v67 = vld [vmem:[%s3 + $0x3c] sm:$0xf]
    %v84 = vunpack.c.l.b16 %v52
    %v85 = vunpack.c.l.b16 %v53
    %v86 = vunpack.c.l.b16 %v54
    %v87 = vunpack.c.l.b16 %v55
    %v88 = vunpack.c.l.b16 %v56
    %v89 = vunpack.c.l.b16 %v57
    %v90 = vunpack.c.l.b16 %v58
    %v91 = vunpack.c.l.b16 %v59
    %v92 = vunpack.c.l.b16 %v60
    %v93 = vunpack.c.l.b16 %v61
    %v94 = vunpack.c.l.b16 %v62
    %v95 = vunpack.c.l.b16 %v63
    %v96 = vunpack.c.l.b16 %v64
    %v97 = vunpack.c.l.b16 %v65
    %v98 = vunpack.c.l.b16 %v66
    %v99 = vunpack.c.l.b16 %v67
    %v100 = vpack.c.b16 %v85, %v84
    %v101 = vpack.c.b16 %v87, %v86
    %v102 = vpack.c.b16 %v89, %v88
    %v103 = vpack.c.b16 %v91, %v90
    %v104 = vpack.c.b16 %v93, %v92
    %v105 = vpack.c.b16 %v95, %v94
    %v106 = vpack.c.b16 %v97, %v96
    %v107 = vpack.c.b16 %v99, %v98
    %116 = vmatprep.subr.bf16.mxu0 0
    %117 = vmatpush1.bf16.msra.mxu0 %v100
    %118 = vmatprep.subr.bf16.mxu0 0
    %119 = vmatpush1.bf16.msra.mxu0 %v101
    %120 = vmatprep.subr.bf16.mxu0 0
    %121 = vmatpush1.bf16.msra.mxu0 %v102
    %122 = vmatprep.subr.bf16.mxu0 0
    %123 = vmatpush1.bf16.msra.mxu0 %v103
    %124 = vmatprep.subr.bf16.mxu0 0
    %125 = vmatpush1.bf16.msra.mxu0 %v104
    %126 = vmatprep.subr.bf16.mxu0 0
    %127 = vmatpush1.bf16.msra.mxu0 %v105
    %128 = vmatprep.subr.bf16.mxu0 0
    %129 = vmatpush1.bf16.msra.mxu0 %v106
    %130 = vmatprep.subr.bf16.mxu0 0
    %131 = vmatpush1.bf16.msra.mxu0 %v107
    %132 = vmatprep.subr.bf16.mxu0 0
    %133 = vmatpush1.bf16.msra.mxu0 0
    %134 = vmatprep.subr.bf16.mxu0 0
    %135 = vmatpush1.bf16.msra.mxu0 0
    %136 = vmatprep.subr.bf16.mxu0 0
    %137 = vmatpush1.bf16.msra.mxu0 0
    %138 = vmatprep.subr.bf16.mxu0 0
    %139 = vmatpush1.bf16.msra.mxu0 0
    %140 = vmatprep.subr.bf16.mxu0 0
    %141 = vmatpush1.bf16.msra.mxu0 0
    %142 = vmatprep.subr.bf16.mxu0 0
    %143 = vmatpush1.bf16.msra.mxu0 0
    %144 = vmatprep.subr.bf16.mxu0 0
    %145 = vmatpush1.bf16.msra.mxu0 0
    %146 = vmatprep.subr.bf16.mxu0 0
    %147 = vmatpush1.bf16.msra.mxu0 0
    %148 = vmatprep.mubr.bf16.mxu0 0
    %149 = vmatmul.mubr.bf16.gmra.mrb[0].mxu0 %v35
    %v150 = vpop.f32.mrb[0].mxu0
    %v151 = vadd.f32 0.0, %v150
    %v152 = vpop.f32.mrb[0].mxu0
    %v153 = vpop.f32.mrb[0].mxu0
    %v154 = vpop.f32.mrb[0].mxu0
    %155 = vdwg.mxu0
    %v172 = vunpack.c.l.b16 %v36
    %v173 = vunpack.c.l.b16 %v37
    %v174 = vunpack.c.l.b16 %v38
    %v175 = vunpack.c.l.b16 %v39
    %v176 = vunpack.c.l.b16 %v40
    %v177 = vunpack.c.l.b16 %v41
    %v178 = vunpack.c.l.b16 %v42
    %v179 = vunpack.c.l.b16 %v43
    %v180 = vunpack.c.l.b16 %v44
    %v181 = vunpack.c.l.b16 %v45
    %v182 = vunpack.c.l.b16 %v46
    %v183 = vunpack.c.l.b16 %v47
    %v184 = vunpack.c.l.b16 %v48
    %v185 = vunpack.c.l.b16 %v49
    %v186 = vunpack.c.l.b16 %v50
    %v187 = vunpack.c.l.b16 %v51
    %v188 = vpack.c.b16 %v173, %v172
    %v189 = vpack.c.b16 %v175, %v174
    %v190 = vpack.c.b16 %v177, %v176
    %v191 = vpack.c.b16 %v179, %v178
    %v192 = vpack.c.b16 %v181, %v180
    %v193 = vpack.c.b16 %v183, %v182
    %v194 = vpack.c.b16 %v185, %v184
    %v195 = vpack.c.b16 %v187, %v186
    %204 = vmatprep.subr.bf16.mxu0 0
    %205 = vmatpush1.bf16.msra.mxu0 %v188
    %206 = vmatprep.subr.bf16.mxu0 0
    %207 = vmatpush1.bf16.msra.mxu0 %v189
    %208 = vmatprep.subr.bf16.mxu0 0
    %209 = vmatpush1.bf16.msra.mxu0 %v190
    %210 = vmatprep.subr.bf16.mxu0 0
    %211 = vmatpush1.bf16.msra.mxu0 %v191
    %212 = vmatprep.subr.bf16.mxu0 0
    %213 = vmatpush1.bf16.msra.mxu0 %v192
    %214 = vmatprep.subr.bf16.mxu0 0
    %215 = vmatpush1.bf16.msra.mxu0 %v193
    %216 = vmatprep.subr.bf16.mxu0 0
    %217 = vmatpush1.bf16.msra.mxu0 %v194
    %218 = vmatprep.subr.bf16.mxu0 0
    %219 = vmatpush1.bf16.msra.mxu0 %v195
    %220 = vmatprep.subr.bf16.mxu0 0
    %221 = vmatpush1.bf16.msra.mxu0 0
    %222 = vmatprep.subr.bf16.mxu0 0
    %223 = vmatpush1.bf16.msra.mxu0 0
    %224 = vmatprep.subr.bf16.mxu0 0
    %225 = vmatpush1.bf16.msra.mxu0 0
    %226 = vmatprep.subr.bf16.mxu0 0
    %227 = vmatpush1.bf16.msra.mxu0 0
    %228 = vmatprep.subr.bf16.mxu0 0
    %229 = vmatpush1.bf16.msra.mxu0 0
    %230 = vmatprep.subr.bf16.mxu0 0
    %231 = vmatpush1.bf16.msra.mxu0 0
    %232 = vmatprep.subr.bf16.mxu0 0
    %233 = vmatpush1.bf16.msra.mxu0 0
    %234 = vmatprep.subr.bf16.mxu0 0
    %235 = vmatpush1.bf16.msra.mxu0 0
    %236 = vmatprep.mubr.bf16.mxu0 0
    %237 = vmatmul.mubr.bf16.gmra.mrb[0].mxu0 %v34
    %v238 = vpop.f32.mrb[0].mxu0
    %v239 = vadd.f32 %v151, %v238
    %v240 = vpop.f32.mrb[0].mxu0
    %v241 = vpop.f32.mrb[0].mxu0
    %v242 = vpop.f32.mrb[0].mxu0
    %243 = vdwg.mxu0
    %v244 = vsub.bf16 %v34, %v35
    %v245 = vand.u32 2147450879, %v244
    %v246 = vld [vmem:[%s4] sm:$0xf]
    %v247 = vld [vmem:[%s4 + $0x4] sm:$0xf]
    %v248 = vld [vmem:[%s4 + $0x8] sm:$0xf]
    %v249 = vld [vmem:[%s4 + $0xc] sm:$0xf]
    %v250 = vld [vmem:[%s4 + $0x10] sm:$0xf]
    %v251 = vld [vmem:[%s4 + $0x14] sm:$0xf]
    %v252 = vld [vmem:[%s4 + $0x18] sm:$0xf]
    %v253 = vld [vmem:[%s4 + $0x1c] sm:$0xf]
    %v254 = vld [vmem:[%s4 + $0x20] sm:$0xf]
    %v255 = vld [vmem:[%s4 + $0x24] sm:$0xf]
    %v256 = vld [vmem:[%s4 + $0x28] sm:$0xf]
    %v257 = vld [vmem:[%s4 + $0x2c] sm:$0xf]
    %v258 = vld [vmem:[%s4 + $0x30] sm:$0xf]
    %v259 = vld [vmem:[%s4 + $0x34] sm:$0xf]
    %v260 = vld [vmem:[%s4 + $0x38] sm:$0xf]
    %v261 = vld [vmem:[%s4 + $0x3c] sm:$0xf]
    %v278 = vunpack.c.l.b16 %v246
    %v279 = vunpack.c.l.b16 %v247
    %v280 = vunpack.c.l.b16 %v248
    %v281 = vunpack.c.l.b16 %v249
    %v282 = vunpack.c.l.b16 %v250
    %v283 = vunpack.c.l.b16 %v251
    %v284 = vunpack.c.l.b16 %v252
    %v285 = vunpack.c.l.b16 %v253
    %v286 = vunpack.c.l.b16 %v254
    %v287 = vunpack.c.l.b16 %v255
    %v288 = vunpack.c.l.b16 %v256
    %v289 = vunpack.c.l.b16 %v257
    %v290 = vunpack.c.l.b16 %v258
    %v291 = vunpack.c.l.b16 %v259
    %v292 = vunpack.c.l.b16 %v260
    %v293 = vunpack.c.l.b16 %v261
    %v294 = vpack.c.b16 %v279, %v278
    %v295 = vpack.c.b16 %v281, %v280
    %v296 = vpack.c.b16 %v283, %v282
    %v297 = vpack.c.b16 %v285, %v284
    %v298 = vpack.c.b16 %v287, %v286
    %v299 = vpack.c.b16 %v289, %v288
    %v300 = vpack.c.b16 %v291, %v290
    %v301 = vpack.c.b16 %v293, %v292
    %310 = vmatprep.subr.bf16.mxu0 0
    %311 = vmatpush1.bf16.msra.mxu0 %v294
    %312 = vmatprep.subr.bf16.mxu0 0
    %313 = vmatpush1.bf16.msra.mxu0 %v295
    %314 = vmatprep.subr.bf16.mxu0 0
    %315 = vmatpush1.bf16.msra.mxu0 %v296
    %316 = vmatprep.subr.bf16.mxu0 0
    %317 = vmatpush1.bf16.msra.mxu0 %v297
    %318 = vmatprep.subr.bf16.mxu0 0
    %319 = vmatpush1.bf16.msra.mxu0 %v298
    %320 = vmatprep.subr.bf16.mxu0 0
    %321 = vmatpush1.bf16.msra.mxu0 %v299
    %322 = vmatprep.subr.bf16.mxu0 0
    %323 = vmatpush1.bf16.msra.mxu0 %v300
    %324 = vmatprep.subr.bf16.mxu0 0
    %325 = vmatpush1.bf16.msra.mxu0 %v301
    %326 = vmatprep.subr.bf16.mxu0 0
    %327 = vmatpush1.bf16.msra.mxu0 0
    %328 = vmatprep.subr.bf16.mxu0 0
    %329 = vmatpush1.bf16.msra.mxu0 0
    %330 = vmatprep.subr.bf16.mxu0 0
    %331 = vmatpush1.bf16.msra.mxu0 0
    %332 = vmatprep.subr.bf16.mxu0 0
    %333 = vmatpush1.bf16.msra.mxu0 0
    %334 = vmatprep.subr.bf16.mxu0 0
    %335 = vmatpush1.bf16.msra.mxu0 0
    %336 = vmatprep.subr.bf16.mxu0 0
    %337 = vmatpush1.bf16.msra.mxu0 0
    %338 = vmatprep.subr.bf16.mxu0 0
    %339 = vmatpush1.bf16.msra.mxu0 0
    %340 = vmatprep.subr.bf16.mxu0 0
    %341 = vmatpush1.bf16.msra.mxu0 0
    %342 = vmatprep.mubr.bf16.mxu0 0
    %343 = vmatmul.mubr.bf16.gmra.mrb[0].mxu0 %v245
    %v344 = vpop.f32.mrb[0].mxu0
    %v345 = vadd.f32 0.0, %v344
    %v346 = vpop.f32.mrb[0].mxu0
    %v347 = vpop.f32.mrb[0].mxu0
    %v348 = vpop.f32.mrb[0].mxu0
    %349 = vdwg.mxu0
    %v350 = vadd.f32 %v239, %v345
    %v351 = vmul.bf16 %v34, %v35
    %v352 = vld [vmem:[%s5] sm:$0xf]
    %v353 = vld [vmem:[%s5 + $0x4] sm:$0xf]
    %v354 = vld [vmem:[%s5 + $0x8] sm:$0xf]
    %v355 = vld [vmem:[%s5 + $0xc] sm:$0xf]
    %v356 = vld [vmem:[%s5 + $0x10] sm:$0xf]
    %v357 = vld [vmem:[%s5 + $0x14] sm:$0xf]
    %v358 = vld [vmem:[%s5 + $0x18] sm:$0xf]
    %v359 = vld [vmem:[%s5 + $0x1c] sm:$0xf]
    %v360 = vld [vmem:[%s5 + $0x20] sm:$0xf]
    %v361 = vld [vmem:[%s5 + $0x24] sm:$0xf]
    %v362 = vld [vmem:[%s5 + $0x28] sm:$0xf]
    %v363 = vld [vmem:[%s5 + $0x2c] sm:$0xf]
    %v364 = vld [vmem:[%s5 + $0x30] sm:$0xf]
    %v365 = vld [vmem:[%s5 + $0x34] sm:$0xf]
    %v366 = vld [vmem:[%s5 + $0x38] sm:$0xf]
    %v367 = vld [vmem:[%s5 + $0x3c] sm:$0xf]
    %v384 = vunpack.c.l.b16 %v352
    %v385 = vunpack.c.l.b16 %v353
    %v386 = vunpack.c.l.b16 %v354
    %v387 = vunpack.c.l.b16 %v355
    %v388 = vunpack.c.l.b16 %v356
    %v389 = vunpack.c.l.b16 %v357
    %v390 = vunpack.c.l.b16 %v358
    %v391 = vunpack.c.l.b16 %v359
    %v392 = vunpack.c.l.b16 %v360
    %v393 = vunpack.c.l.b16 %v361
    %v394 = vunpack.c.l.b16 %v362
    %v395 = vunpack.c.l.b16 %v363
    %v396 = vunpack.c.l.b16 %v364
    %v397 = vunpack.c.l.b16 %v365
    %v398 = vunpack.c.l.b16 %v366
    %v399 = vunpack.c.l.b16 %v367
    %v400 = vpack.c.b16 %v385, %v384
    %v401 = vpack.c.b16 %v387, %v386
    %v402 = vpack.c.b16 %v389, %v388
    %v403 = vpack.c.b16 %v391, %v390
    %v404 = vpack.c.b16 %v393, %v392
    %v405 = vpack.c.b16 %v395, %v394
    %v406 = vpack.c.b16 %v397, %v396
    %v407 = vpack.c.b16 %v399, %v398
    %416 = vmatprep.subr.bf16.mxu0 0
    %417 = vmatpush1.bf16.msra.mxu0 %v400
    %418 = vmatprep.subr.bf16.mxu0 0
    %419 = vmatpush1.bf16.msra.mxu0 %v401
    %420 = vmatprep.subr.bf16.mxu0 0
    %421 = vmatpush1.bf16.msra.mxu0 %v402
    %422 = vmatprep.subr.bf16.mxu0 0
    %423 = vmatpush1.bf16.msra.mxu0 %v403
    %424 = vmatprep.subr.bf16.mxu0 0
    %425 = vmatpush1.bf16.msra.mxu0 %v404
    %426 = vmatprep.subr.bf16.mxu0 0
    %427 = vmatpush1.bf16.msra.mxu0 %v405
    %428 = vmatprep.subr.bf16.mxu0 0
    %429 = vmatpush1.bf16.msra.mxu0 %v406
    %430 = vmatprep.subr.bf16.mxu0 0
    %431 = vmatpush1.bf16.msra.mxu0 %v407
    %432 = vmatprep.subr.bf16.mxu0 0
    %433 = vmatpush1.bf16.msra.mxu0 0
    %434 = vmatprep.subr.bf16.mxu0 0
    %435 = vmatpush1.bf16.msra.mxu0 0
    %436 = vmatprep.subr.bf16.mxu0 0
    %437 = vmatpush1.bf16.msra.mxu0 0
    %438 = vmatprep.subr.bf16.mxu0 0
    %439 = vmatpush1.bf16.msra.mxu0 0
    %440 = vmatprep.subr.bf16.mxu0 0
    %441 = vmatpush1.bf16.msra.mxu0 0
    %442 = vmatprep.subr.bf16.mxu0 0
    %443 = vmatpush1.bf16.msra.mxu0 0
    %444 = vmatprep.subr.bf16.mxu0 0
    %445 = vmatpush1.bf16.msra.mxu0 0
    %446 = vmatprep.subr.bf16.mxu0 0
    %447 = vmatpush1.bf16.msra.mxu0 0
    %448 = vmatprep.mubr.bf16.mxu0 0
    %449 = vmatmul.mubr.bf16.gmra.mrb[0].mxu0 %v351
    %v450 = vpop.f32.mrb[0].mxu0
    %v451 = vadd.f32 0.0, %v450
    %v452 = vpop.f32.mrb[0].mxu0
    %v453 = vpop.f32.mrb[0].mxu0
    %v454 = vpop.f32.mrb[0].mxu0
    %455 = vdwg.mxu0
    %v456 = vadd.f32 %v350, %v451
    %v457 = vld [vmem:[%s6] sm:$0x1]
    %v459 = vlaneseq
    %v460 = vshrl.u32 %v459, 7
    %v461 = vsub.s32 0, %v460
    %v462 = vrot.slane %v457, %v461
    %v464 = vadd.f32 %v456, %v462
    %v465 = vmax.f32 %v464, 0.0
    %v466 = vpack.c.bf16 %v465, %v465
    %v467 = vld [vmem:[%s7] sm:$0xf]
    %v468 = vld [vmem:[%s7 + $0x4] sm:$0xf]
    %v469 = vld [vmem:[%s7 + $0x8] sm:$0xf]
    %v470 = vld [vmem:[%s7 + $0xc] sm:$0xf]
    %v471 = vld [vmem:[%s7 + $0x10] sm:$0xf]
    %v472 = vld [vmem:[%s7 + $0x14] sm:$0xf]
    %v473 = vld [vmem:[%s7 + $0x18] sm:$0xf]
    %v474 = vld [vmem:[%s7 + $0x1c] sm:$0xf]
    %v475 = vld [vmem:[%s7 + $0x20] sm:$0xf]
    %v476 = vld [vmem:[%s7 + $0x24] sm:$0xf]
    %v477 = vld [vmem:[%s7 + $0x28] sm:$0xf]
    %v478 = vld [vmem:[%s7 + $0x2c] sm:$0xf]
    %v479 = vld [vmem:[%s7 + $0x30] sm:$0xf]
    %v480 = vld [vmem:[%s7 + $0x34] sm:$0xf]
    %v481 = vld [vmem:[%s7 + $0x38] sm:$0xf]
    %v482 = vld [vmem:[%s7 + $0x3c] sm:$0xf]
    %v483 = vld [vmem:[%s8] sm:$0x1]
    %v485 = vlaneseq
    %v486 = vshrl.u32 %v485, 7
    %v487 = vsub.s32 0, %v486
    %v488 = vrot.slane %v483, %v487
    %v506 = vunpack.c.l.b16 %v467
    %v507 = vunpack.c.l.b16 %v468
    %v508 = vunpack.c.l.b16 %v469
    %v509 = vunpack.c.l.b16 %v470
    %v510 = vunpack.c.l.b16 %v471
    %v511 = vunpack.c.l.b16 %v472
    %v512 = vunpack.c.l.b16 %v473
    %v513 = vunpack.c.l.b16 %v474
    %v514 = vunpack.c.l.b16 %v475
    %v515 = vunpack.c.l.b16 %v476
    %v516 = vunpack.c.l.b16 %v477
    %v517 = vunpack.c.l.b16 %v478
    %v518 = vunpack.c.l.b16 %v479
    %v519 = vunpack.c.l.b16 %v480
    %v520 = vunpack.c.l.b16 %v481
    %v521 = vunpack.c.l.b16 %v482
    %v522 = vpack.c.b16 %v507, %v506
    %v523 = vpack.c.b16 %v509, %v508
    %v524 = vpack.c.b16 %v511, %v510
    %v525 = vpack.c.b16 %v513, %v512
    %v526 = vpack.c.b16 %v515, %v514
    %v527 = vpack.c.b16 %v517, %v516
    %v528 = vpack.c.b16 %v519, %v518
    %v529 = vpack.c.b16 %v521, %v520
    %538 = vmatprep.subr.bf16.mxu0 0
    %539 = vmatpush1.bf16.msra.mxu0 %v522
    %540 = vmatprep.subr.bf16.mxu0 0
    %541 = vmatpush1.bf16.msra.mxu0 %v523
    %542 = vmatprep.subr.bf16.mxu0 0
    %543 = vmatpush1.bf16.msra.mxu0 %v524
    %544 = vmatprep.subr.bf16.mxu0 0
    %545 = vmatpush1.bf16.msra.mxu0 %v525
    %546 = vmatprep.subr.bf16.mxu0 0
    %547 = vmatpush1.bf16.msra.mxu0 %v526
    %548 = vmatprep.subr.bf16.mxu0 0
    %549 = vmatpush1.bf16.msra.mxu0 %v527
    %550 = vmatprep.subr.bf16.mxu0 0
    %551 = vmatpush1.bf16.msra.mxu0 %v528
    %552 = vmatprep.subr.bf16.mxu0 0
    %553 = vmatpush1.bf16.msra.mxu0 %v529
    %554 = vmatprep.subr.bf16.mxu0 0
    %555 = vmatpush1.bf16.msra.mxu0 0
    %556 = vmatprep.subr.bf16.mxu0 0
    %557 = vmatpush1.bf16.msra.mxu0 0
    %558 = vmatprep.subr.bf16.mxu0 0
    %559 = vmatpush1.bf16.msra.mxu0 0
    %560 = vmatprep.subr.bf16.mxu0 0
    %561 = vmatpush1.bf16.msra.mxu0 0
    %562 = vmatprep.subr.bf16.mxu0 0
    %563 = vmatpush1.bf16.msra.mxu0 0
    %564 = vmatprep.subr.bf16.mxu0 0
    %565 = vmatpush1.bf16.msra.mxu0 0
    %566 = vmatprep.subr.bf16.mxu0 0
    %567 = vmatpush1.bf16.msra.mxu0 0
    %568 = vmatprep.subr.bf16.mxu0 0
    %569 = vmatpush1.bf16.msra.mxu0 0
    %570 = vmatprep.mubr.bf16.mxu0 0
    %571 = vmatmul.mubr.bf16.gmra.mrb[0].mxu0 %v466
    %v572 = vpop.f32.mrb[0].mxu0
    %v573 = vadd.f32 %v488, %v572
    %v574 = vpop.f32.mrb[0].mxu0
    %v575 = vpop.f32.mrb[0].mxu0
    %v576 = vpop.f32.mrb[0].mxu0
    %577 = vdwg.mxu0
    %578 = vst [vmem:[#allocation2] sm:$0xff] %v573
    // Predicated region
    $region38: #{final_model_forward.3} parent=1 // pred_check
      _
    $region39: #{final_model_forward.3} parent=1 // pred_check_branch
      %580 = sbr.rel (0) target = $region41
    $region40: #{final_model_forward.3} parent=1 // pred_region
      %s582 = ssub.s32 128, 128
      %583 = vsyncadd [#allocation3], %s582
      %s585 = sshll.u32 [#allocation2], 4
      %s586 = int_to_ptr.vmem [resolvable:$true] %s585
      %588 = dma.vmem_to_hbm [thread:$0]  %s586, 128, %s9, [#allocation3]
    $region41: #{final_model_forward.3} parent=1 // pred_fallthru
      _
    // Predicated region
    $region42: #{final_model_forward.3} parent=1 // pred_check
      _
    $region43: #{final_model_forward.3} parent=1 // pred_check_branch
      %590 = sbr.rel (0) target = $region45
    $region44: #{final_model_forward.3} parent=1 // pred_region
      %591 = dma.done [#allocation3], 128
    $region45: #{final_model_forward.3} parent=1 // pred_fallthru
      _
    %592 = vsyncpa [#allocation3], 1

</llo_original>
